<compile_context>
chip_gen: v6e
topology: v6e:2x2x1
jax: 0.10.0
libtpu: 0.0.40
codegen_flags: <defaults>
</compile_context>

<pallas_src>
import functools

import jax
import jax.numpy as jnp
from jax.experimental import pallas as pl
from jax.experimental.pallas import tpu as pltpu

HIDDEN = 128
N_PAD = 128   # lane-dense padded output width
K_PAD = 8     # layer-1 contraction padded 4 -> 8 (sublane-aligned)
MAX_TILE_B = 8192


def _round_up(n: int, m: int) -> int:
    return ((n + m - 1) // m) * m


def qnet_kernel(x_ref, w1_ref, b1_ref, w2_ref, b2_ref, w3_ref, b3_ref, o_ref):
    """One batch tile: three MXU matmuls (bf16 operands, f32 acc) + f32 bias/ReLU."""
    # Layer 1: (tb, 8) @ (8, 128) on the MXU (K padded with zeros).
    h1 = jnp.dot(x_ref[...], w1_ref[...],
                 preferred_element_type=jnp.float32) + b1_ref[...]
    h1 = jnp.maximum(h1, 0.0)

    # Layer 2: (tb, 128) @ (128, 128).
    h2 = jnp.dot(h1.astype(jnp.bfloat16), w2_ref[...],
                 preferred_element_type=jnp.float32) + b2_ref[...]
    h2 = jnp.maximum(h2, 0.0)

    # Layer 3: lane-dense (128-wide, zero-padded) output slab, stored as bf16.
    out = jnp.dot(h2.astype(jnp.bfloat16), w3_ref[...],
                  preferred_element_type=jnp.float32) + b3_ref[...]
    o_ref[...] = out.astype(o_ref.dtype)


def _choose_tile(B: int, tile_b: int) -> int:
    """Adaptive tile: large tiles, low padding, >=2 tiles when B allows (megacore)."""
    tile_b = max(16, min(tile_b, MAX_TILE_B))
    n_tiles = max(2, pl.cdiv(B, tile_b))          # prefer >=2 tiles for 2-TC chips
    tb = _round_up(pl.cdiv(B, n_tiles), 16)       # 16: bf16 sublane packing
    return max(16, min(tb, tile_b))


def _vmem_budget(tb: int) -> int:
    """Per-tile VMEM footprint estimate (bytes), with headroom, capped for v7x."""
    dma = 2 * (tb * 128 * 2) * 2                  # double-buffered x (lane-padded) + out, bf16
    temps = tb * 128 * (4 + 4 + 2 + 2 + 4)        # h1/h2 f32, bf16 casts, out f32
    weights = 1 << 20
    return int(min(48 << 20, max(16 << 20, dma + temps + weights)))


@functools.partial(jax.jit, static_argnames=("tile_b",))
def qnet_forward(x, params, *, tile_b: int = 4096):
    """x: (B, 4) float32; params: dict of weights/biases. Returns (B, action_size) f32."""
    w1 = params["w1"].astype(jnp.float32)   # (4, 128)
    b1 = params["b1"].astype(jnp.float32)   # (1, 128)
    w2 = params["w2"].astype(jnp.bfloat16)  # (128, 128) — MXU operand
    b2 = params["b2"].astype(jnp.float32)   # (1, 128)
    w3 = params["w3"].astype(jnp.float32)   # (128, action_size)
    b3 = params["b3"].astype(jnp.float32)   # (1, action_size)

    B = x.shape[0]
    action_size = w3.shape[1]

    # Layer-1 weight padded (4 -> 8 rows) and cast to bf16 for the MXU path.
    w1p = jnp.zeros((K_PAD, HIDDEN), jnp.float32).at[:4, :].set(w1).astype(jnp.bfloat16)

    # Lane-dense output: zero-pad fc3 to 128 output columns.
    w3p = jnp.zeros((HIDDEN, N_PAD), jnp.float32).at[:, :action_size].set(w3)
    w3p = w3p.astype(jnp.bfloat16)
    b3p = jnp.zeros((1, N_PAD), jnp.float32).at[:, :action_size].set(b3)

    # Batch tiling (adaptive: low padding, >=2 tiles when possible).
    tb = _choose_tile(B, tile_b)
    Bp = _round_up(B, tb)
    xp = jnp.zeros((Bp, K_PAD), jnp.bfloat16)
    xp = xp.at[:B, :4].set(x.astype(jnp.bfloat16))

    grid = (Bp // tb,)

    flops = 2 * Bp * HIDDEN * (K_PAD + HIDDEN + N_PAD)
    bytes_accessed = (Bp * K_PAD * 2                       # x (bf16)
                      + Bp * N_PAD * 2                     # out (bf16)
                      + (K_PAD + 2 * HIDDEN + N_PAD) * HIDDEN * 2  # weights
                      + 3 * HIDDEN * 4)                    # biases

    out = pl.pallas_call(
        qnet_kernel,
        out_shape=jax.ShapeDtypeStruct((Bp, N_PAD), jnp.bfloat16),
        grid=grid,
        in_specs=[
            pl.BlockSpec((tb, K_PAD), lambda i: (i, 0)),       # x: tiled over batch
            pl.BlockSpec((K_PAD, HIDDEN), lambda i: (0, 0)),   # w1 padded (bf16)
            pl.BlockSpec((1, HIDDEN), lambda i: (0, 0)),       # b1
            pl.BlockSpec((HIDDEN, HIDDEN), lambda i: (0, 0)),  # w2 (bf16)
            pl.BlockSpec((1, HIDDEN), lambda i: (0, 0)),       # b2
            pl.BlockSpec((HIDDEN, N_PAD), lambda i: (0, 0)),   # w3 padded (bf16)
            pl.BlockSpec((1, N_PAD), lambda i: (0, 0)),        # b3 padded
        ],
        out_specs=pl.BlockSpec((tb, N_PAD), lambda i: (i, 0)),
        compiler_params=pltpu.CompilerParams(
            dimension_semantics=("parallel",),     # megacore sharding on 2-TC chips
            vmem_limit_bytes=_vmem_budget(tb),
        ),
        cost_estimate=pl.CostEstimate(
            flops=flops, transcendentals=0, bytes_accessed=bytes_accessed),
    )(xp, w1p, b1, w2, b2, w3p, b3p)

    return out[:B, :action_size].astype(jnp.float32)


def init_params(key, action_size: int):
    """Deterministic synthetic params matching nn.Linear shapes (stored transposed)."""
    k1, k2, k3, k4, k5, k6 = jax.random.split(key, 6)

    def lin(kw, kb, fan_in, fan_out):
        bound = 1.0 / jnp.sqrt(float(fan_in))
        w = jax.random.uniform(kw, (fan_in, fan_out), jnp.float32, -bound, bound)
        b = jax.random.uniform(kb, (1, fan_out), jnp.float32, -bound, bound)
        return w, b

    w1, b1 = lin(k1, k2, 4, HIDDEN)
    w2, b2 = lin(k3, k4, HIDDEN, HIDDEN)
    w3, b3 = lin(k5, k6, HIDDEN, action_size)
    return dict(w1=w1, b1=b1, w2=w2, b2=b2, w3=w3, b3=b3)


def qnet_reference_f32(x, p):
    """Pure-f32 reference (exact PyTorch forward semantics)."""
    h1 = jax.nn.relu(x @ p["w1"] + p["b1"])
    h2 = jax.nn.relu(h1 @ p["w2"] + p["b2"])
    return h2 @ p["w3"] + p["b3"]


def qnet_reference_matched(x, p):
    """Reference matching the kernel's bf16-operand / f32-accumulate / bf16-store precision."""
    h1 = jax.nn.relu(
        jnp.dot(x.astype(jnp.bfloat16), p["w1"].astype(jnp.bfloat16),
                preferred_element_type=jnp.float32) + p["b1"])
    h2 = jax.nn.relu(
        jnp.dot(h1.astype(jnp.bfloat16), p["w2"].astype(jnp.bfloat16),
                preferred_element_type=jnp.float32) + p["b2"])
    out = (jnp.dot(h2.astype(jnp.bfloat16), p["w3"].astype(jnp.bfloat16),
                   preferred_element_type=jnp.float32) + p["b3"])
    return out.astype(jnp.bfloat16).astype(jnp.float32)


if __name__ == "__main__":
    key = jax.random.PRNGKey(0)
    k_x, k_x2, k_p = jax.random.split(key, 3)

    action_size = 2  # e.g. CartPole

    # Small case (batch=2) — matches the toy usage of the module.
    batch = 2
    x = jax.random.normal(k_x, (batch, 4), dtype=jnp.float32)
    params = init_params(k_p, action_size)

    out = jax.block_until_ready(qnet_forward(x, params))
    assert out.shape == (batch, action_size)
    ref_m = qnet_reference_matched(x, params)
    ref_f = qnet_reference_f32(x, params)
    assert jnp.allclose(out, ref_m, atol=1e-2, rtol=1e-2), "mismatch vs matched-precision ref"
    assert jnp.allclose(out, ref_f, atol=5e-2, rtol=5e-2), "mismatch vs f32 semantics ref"

    # Larger, non-multiple-of-tile batch — exercises the multi-tile (grid=2) path.
    batch2 = 600
    x2 = jax.random.normal(k_x2, (batch2, 4), dtype=jnp.float32)
    out2 = jax.block_until_ready(qnet_forward(x2, params))
    assert out2.shape == (batch2, action_size)
    ref2_m = qnet_reference_matched(x2, params)
    ref2_f = qnet_reference_f32(x2, params)
    assert jnp.allclose(out2, ref2_m, atol=1e-2, rtol=1e-2), "tiled mismatch vs matched ref"
    assert jnp.allclose(out2, ref2_f, atol=5e-2, rtol=5e-2), "tiled mismatch vs f32 ref"

    print("KERNEL_OK")
</pallas_src>

<mosaic_0001>
module attributes {stable_mosaic.version = 11 : i64} {
  func.func @qnet_kernel(%arg0: i32, %arg1: memref<16x8xbf16, #tpu.memory_space<vmem>>, %arg2: memref<8x128xbf16, #tpu.memory_space<vmem>>, %arg3: memref<1x128xf32, #tpu.memory_space<vmem>>, %arg4: memref<128x128xbf16, #tpu.memory_space<vmem>>, %arg5: memref<1x128xf32, #tpu.memory_space<vmem>>, %arg6: memref<128x128xbf16, #tpu.memory_space<vmem>>, %arg7: memref<1x128xf32, #tpu.memory_space<vmem>>, %arg8: memref<16x128xbf16, #tpu.memory_space<vmem>>) attributes {dimension_semantics = [#tpu.dimension_semantics<parallel>], iteration_bounds = array<i64: 1>, scalar_prefetch = 0 : i64, scratch_operands = 0 : i64, tpu.core_type = #tpu.core_type<tc>, window_params = [{transform_indices = @transform_0, window_bounds = array<i64: 16, 8>}, {pipeline_mode = #tpu.pipeline_mode<synchronous>, transform_indices = @transform_1, window_bounds = array<i64: 8, 128>}, {pipeline_mode = #tpu.pipeline_mode<synchronous>, transform_indices = @transform_2, window_bounds = array<i64: 1, 128>}, {pipeline_mode = #tpu.pipeline_mode<synchronous>, transform_indices = @transform_3, window_bounds = array<i64: 128, 128>}, {pipeline_mode = #tpu.pipeline_mode<synchronous>, transform_indices = @transform_4, window_bounds = array<i64: 1, 128>}, {pipeline_mode = #tpu.pipeline_mode<synchronous>, transform_indices = @transform_5, window_bounds = array<i64: 128, 128>}, {pipeline_mode = #tpu.pipeline_mode<synchronous>, transform_indices = @transform_6, window_bounds = array<i64: 1, 128>}, {transform_indices = @transform_7, window_bounds = array<i64: 16, 128>}]} {
    %c0 = arith.constant 0 : index
    %c0_0 = arith.constant 0 : index
    %0 = vector.load %arg1[%c0, %c0_0] : memref<16x8xbf16, #tpu.memory_space<vmem>>, vector<16x8xbf16>
    %c0_1 = arith.constant 0 : index
    %c0_2 = arith.constant 0 : index
    %1 = vector.load %arg2[%c0_1, %c0_2] : memref<8x128xbf16, #tpu.memory_space<vmem>>, vector<8x128xbf16>
    %cst = arith.constant dense<0.000000e+00> : vector<16x128xf32>
    %2 = tpu.matmul %0, %1, %cst {dimension_numbers = #tpu.dot_dimension_numbers<[1], [0], [0], [1], [0, 0, 1, 1], [], []>} : vector<16x8xbf16>, vector<8x128xbf16>, vector<16x128xf32> -> vector<16x128xf32>
    %c0_3 = arith.constant 0 : index
    %c0_4 = arith.constant 0 : index
    %3 = vector.load %arg3[%c0_3, %c0_4] : memref<1x128xf32, #tpu.memory_space<vmem>>, vector<1x128xf32>
    %4 = vector.broadcast %3 : vector<1x128xf32> to vector<16x128xf32>
    %5 = arith.addf %2, %4 : vector<16x128xf32>
    %cst_5 = arith.constant 0.000000e+00 : f32
    %6 = vector.broadcast %cst_5 : f32 to vector<16x128xf32>
    %7 = arith.maximumf %5, %6 : vector<16x128xf32>
    %8 = arith.truncf %7 : vector<16x128xf32> to vector<16x128xbf16>
    %c0_6 = arith.constant 0 : index
    %c0_7 = arith.constant 0 : index
    %9 = vector.load %arg4[%c0_6, %c0_7] : memref<128x128xbf16, #tpu.memory_space<vmem>>, vector<128x128xbf16>
    %cst_8 = arith.constant dense<0.000000e+00> : vector<16x128xf32>
    %10 = tpu.matmul %8, %9, %cst_8 {dimension_numbers = #tpu.dot_dimension_numbers<[1], [0], [0], [1], [0, 0, 1, 1], [], []>} : vector<16x128xbf16>, vector<128x128xbf16>, vector<16x128xf32> -> vector<16x128xf32>
    %c0_9 = arith.constant 0 : index
    %c0_10 = arith.constant 0 : index
    %11 = vector.load %arg5[%c0_9, %c0_10] : memref<1x128xf32, #tpu.memory_space<vmem>>, vector<1x128xf32>
    %12 = vector.broadcast %11 : vector<1x128xf32> to vector<16x128xf32>
    %13 = arith.addf %10, %12 : vector<16x128xf32>
    %cst_11 = arith.constant 0.000000e+00 : f32
    %14 = vector.broadcast %cst_11 : f32 to vector<16x128xf32>
    %15 = arith.maximumf %13, %14 : vector<16x128xf32>
    %16 = arith.truncf %15 : vector<16x128xf32> to vector<16x128xbf16>
    %c0_12 = arith.constant 0 : index
    %c0_13 = arith.constant 0 : index
    %17 = vector.load %arg6[%c0_12, %c0_13] : memref<128x128xbf16, #tpu.memory_space<vmem>>, vector<128x128xbf16>
    %cst_14 = arith.constant dense<0.000000e+00> : vector<16x128xf32>
    %18 = tpu.matmul %16, %17, %cst_14 {dimension_numbers = #tpu.dot_dimension_numbers<[1], [0], [0], [1], [0, 0, 1, 1], [], []>} : vector<16x128xbf16>, vector<128x128xbf16>, vector<16x128xf32> -> vector<16x128xf32>
    %c0_15 = arith.constant 0 : index
    %c0_16 = arith.constant 0 : index
    %19 = vector.load %arg7[%c0_15, %c0_16] : memref<1x128xf32, #tpu.memory_space<vmem>>, vector<1x128xf32>
    %20 = vector.broadcast %19 : vector<1x128xf32> to vector<16x128xf32>
    %21 = arith.addf %18, %20 : vector<16x128xf32>
    %22 = arith.truncf %21 : vector<16x128xf32> to vector<16x128xbf16>
    %c0_17 = arith.constant 0 : index
    %c0_18 = arith.constant 0 : index
    %23 = vector.load %arg8[%c0_17, %c0_18] : memref<16x128xbf16, #tpu.memory_space<vmem>>, vector<16x128xbf16>
    tpu.vector_store %arg8[%c0_17, %c0_18], %22 {strides = array<i32>} : memref<16x128xbf16, #tpu.memory_space<vmem>>, vector<16x128xbf16>,
    return
  }
  func.func @transform_0(%arg0: i32) -> (i32, i32) {
    %c0_i32 = arith.constant 0 : i32
    %c0_i32_0 = arith.constant 0 : i32
    return %arg0, %c0_i32 : i32, i32
  }
  func.func @transform_1(%arg0: i32) -> (i32, i32) {
    %c0_i32 = arith.constant 0 : i32
    %c0_i32_0 = arith.constant 0 : i32
    %c0_i32_1 = arith.constant 0 : i32
    return %c0_i32, %c0_i32_0 : i32, i32
  }
  func.func @transform_2(%arg0: i32) -> (i32, i32) {
    %c0_i32 = arith.constant 0 : i32
    %c0_i32_0 = arith.constant 0 : i32
    %c0_i32_1 = arith.constant 0 : i32
    return %c0_i32, %c0_i32_0 : i32, i32
  }
  func.func @transform_3(%arg0: i32) -> (i32, i32) {
    %c0_i32 = arith.constant 0 : i32
    %c0_i32_0 = arith.constant 0 : i32
    %c0_i32_1 = arith.constant 0 : i32
    return %c0_i32, %c0_i32_0 : i32, i32
  }
  func.func @transform_4(%arg0: i32) -> (i32, i32) {
    %c0_i32 = arith.constant 0 : i32
    %c0_i32_0 = arith.constant 0 : i32
    %c0_i32_1 = arith.constant 0 : i32
    return %c0_i32, %c0_i32_0 : i32, i32
  }
  func.func @transform_5(%arg0: i32) -> (i32, i32) {
    %c0_i32 = arith.constant 0 : i32
    %c0_i32_0 = arith.constant 0 : i32
    %c0_i32_1 = arith.constant 0 : i32
    return %c0_i32, %c0_i32_0 : i32, i32
  }
  func.func @transform_6(%arg0: i32) -> (i32, i32) {
    %c0_i32 = arith.constant 0 : i32
    %c0_i32_0 = arith.constant 0 : i32
    %c0_i32_1 = arith.constant 0 : i32
    return %c0_i32, %c0_i32_0 : i32, i32
  }
  func.func @transform_7(%arg0: i32) -> (i32, i32) {
    %c0_i32 = arith.constant 0 : i32
    %c0_i32_0 = arith.constant 0 : i32
    return %arg0, %c0_i32 : i32, i32
  }
}

</mosaic_0001>

<llo_original>
// kernel: qnet_forward.1
$region0: #{qnet_forward.1}
  #allocation0 [shape = 'u32[]', space=smem, size = 0x4, offset = 0x4, fixed_abs, tag = 'smem constant byte address 0x4 - core index']
  #allocation1 [shape = 'u32[144,128]{1,0:T(1,128)}', space=vmem, size = 0x12000, scoped, tag = 'internal scratch']
  %s0 = inlined_call_operand.vmem [shape: bf16[16,8], index: 0, kind: input, shape index: {}]
  %s1 = inlined_call_operand.vmem [shape: bf16[8,128], index: 1, kind: input, shape index: {}]
  %s2 = inlined_call_operand.vmem [shape: f32[1,128], index: 2, kind: input, shape index: {}]
  %s3 = inlined_call_operand.vmem [shape: bf16[128,128], index: 3, kind: input, shape index: {}]
  %s4 = inlined_call_operand.vmem [shape: f32[1,128], index: 4, kind: input, shape index: {}]
  %s5 = inlined_call_operand.vmem [shape: bf16[128,128], index: 5, kind: input, shape index: {}]
  %s6 = inlined_call_operand.vmem [shape: f32[1,128], index: 6, kind: input, shape index: {}]
  %s7 = inlined_call_operand.vmem [shape: bf16[16,128], index: 7, kind: output, shape index: {}]
  %s8 = sld [smem:[#allocation0]]
  $region38: #{qnet_forward.1} parent=0
    _
  %s10 = ssub.s32 1, %s8
  %s11 = scalar_select 0, %s10, %s8
  // Predicated region
  $region2: #{qnet_forward.1} parent=0 // pred_check
    _
  $region3: #{qnet_forward.1} parent=0 // pred_check_branch
    %13 = sbr.rel (0) target = $region5
  $region4: #{qnet_forward.1} parent=0 // pred_region
    _
  $region5: #{qnet_forward.1} parent=0 // pred_fallthru
    _
  // Predicated region
  $region6: #{qnet_forward.1} parent=0 // pred_check
    _
  $region7: #{qnet_forward.1} parent=0 // pred_check_branch
    %15 = sbr.rel (0) target = $region9
  $region8: #{qnet_forward.1} parent=0 // pred_region
    _
  $region9: #{qnet_forward.1} parent=0 // pred_fallthru
    _
  // Predicated region
  $region10: #{qnet_forward.1} parent=0 // pred_check
    _
  $region11: #{qnet_forward.1} parent=0 // pred_check_branch
    %17 = sbr.rel (0) target = $region13
  $region12: #{qnet_forward.1} parent=0 // pred_region
    _
  $region13: #{qnet_forward.1} parent=0 // pred_fallthru
    _
  // Predicated region
  $region14: #{qnet_forward.1} parent=0 // pred_check
    _
  $region15: #{qnet_forward.1} parent=0 // pred_check_branch
    %19 = sbr.rel (0) target = $region17
  $region16: #{qnet_forward.1} parent=0 // pred_region
    _
  $region17: #{qnet_forward.1} parent=0 // pred_fallthru
    _
  // Predicated region
  $region18: #{qnet_forward.1} parent=0 // pred_check
    _
  $region19: #{qnet_forward.1} parent=0 // pred_check_branch
    %21 = sbr.rel (0) target = $region21
  $region20: #{qnet_forward.1} parent=0 // pred_region
    _
  $region21: #{qnet_forward.1} parent=0 // pred_fallthru
    _
  // Predicated region
  $region22: #{qnet_forward.1} parent=0 // pred_check
    _
  $region23: #{qnet_forward.1} parent=0 // pred_check_branch
    %23 = sbr.rel (0) target = $region25
  $region24: #{qnet_forward.1} parent=0 // pred_region
    _
  $region25: #{qnet_forward.1} parent=0 // pred_fallthru
    _
  // Predicated region
  $region26: #{qnet_forward.1} parent=0 // pred_check
    _
  $region27: #{qnet_forward.1} parent=0 // pred_check_branch
    %25 = sbr.rel (0) target = $region29
  $region28: #{qnet_forward.1} parent=0 // pred_region
    _
  $region29: #{qnet_forward.1} parent=0 // pred_fallthru
    _
  %v27 = vld [vmem:[%s0] sm:$0xf]
  %v28 = vld [vmem:[%s0 + $0x4] sm:$0xf]
  %v29 = vld [vmem:[%s1] sm:$0xf]
  %v30 = vld [vmem:[%s2] sm:$0x1]
  %v32 = vlaneseq
  %v33 = vshrl.u32 %v32, 7
  %v34 = vsub.s32 0, %v33
  %v35 = vrot.slane %v30, %v34
  %v39 = vunpack.c.l.b16 %v27
  %v40 = vunpack.c.l.b16 %v28
  %v41 = vpack.c.b16 %v40, %v39
  %vm42 = vcmask 64512
  %v44 = vsel %vm42, %v41, 0
  %vm46 = vcmask 1043456
  %v48 = vsel %vm46, %v29, 0
  %50 = vmatprep.subr.bf16.mxu0 0
  %51 = vmatpush1.bf16.msra.mxu0 0
  %52 = vmatprep.subr.bf16.mxu0 0
  %53 = vmatpush1.bf16.msra.mxu0 0
  %54 = vmatprep.subr.bf16.mxu0 0
  %55 = vmatpush1.bf16.msra.mxu0 0
  %56 = vmatprep.subr.bf16.mxu0 0
  %57 = vmatpush1.bf16.msra.mxu0 0
  %58 = vmatprep.subr.bf16.mxu0 0
  %59 = vmatpush1.bf16.msra.mxu0 0
  %60 = vmatprep.subr.bf16.mxu0 0
  %61 = vmatpush1.bf16.msra.mxu0 0
  %62 = vmatprep.subr.bf16.mxu0 0
  %63 = vmatpush1.bf16.msra.mxu0 0
  %64 = vmatprep.subr.bf16.mxu0 0
  %65 = vmatpush1.bf16.msra.mxu0 %v48
  %66 = vmatprep.subr.bf16.mxu0 0
  %67 = vmatpush2.bf16.msra.mxu0 0
  %68 = vmatprep.subr.bf16.mxu0 0
  %69 = vmatpush2.bf16.msra.mxu0 0
  %70 = vmatprep.subr.bf16.mxu0 0
  %71 = vmatpush2.bf16.msra.mxu0 0
  %72 = vmatprep.subr.bf16.mxu0 0
  %73 = vmatpush2.bf16.msra.mxu0 0
  %74 = vmatprep.subr.bf16.mxu0 0
  %75 = vmatpush2.bf16.msra.mxu0 0
  %76 = vmatprep.subr.bf16.mxu0 0
  %77 = vmatpush2.bf16.msra.mxu0 0
  %78 = vmatprep.subr.bf16.mxu0 0
  %79 = vmatpush2.bf16.msra.mxu0 0
  %80 = vmatprep.subr.bf16.mxu0 0
  %81 = vmatpush2.bf16.msra.mxu0 0
  %82 = vmatprep.mubr.bf16.mxu0 0
  %83 = vmatmul.mubr.bf16.gmra.mxu0 %v44
  %v84 = vpop.f32.mrf.mxu0
  %v85 = vadd.f32 %v35, %v84
  %v86 = vpop.f32.mrf.mxu0
  %v87 = vpop.f32.mrf.mxu0
  %v88 = vadd.f32 %v35, %v87
  %v89 = vpop.f32.mrf.mxu0
  %90 = vdwg.mxu0
  %v91 = vmax.f32 %v85, 0.0
  %v92 = vmax.f32 %v88, 0.0
  %v93 = vpack.c.bf16 %v92, %v91
  %v94 = vld [vmem:[%s3] sm:$0xf]
  %v95 = vld [vmem:[%s3 + $0x4] sm:$0xf]
  %v96 = vld [vmem:[%s3 + $0x8] sm:$0xf]
  %v97 = vld [vmem:[%s3 + $0xc] sm:$0xf]
  %v98 = vld [vmem:[%s3 + $0x10] sm:$0xf]
  %v99 = vld [vmem:[%s3 + $0x14] sm:$0xf]
  %v100 = vld [vmem:[%s3 + $0x18] sm:$0xf]
  %v101 = vld [vmem:[%s3 + $0x1c] sm:$0xf]
  %v102 = vld [vmem:[%s3 + $0x20] sm:$0xf]
  %v103 = vld [vmem:[%s3 + $0x24] sm:$0xf]
  %v104 = vld [vmem:[%s3 + $0x28] sm:$0xf]
  %v105 = vld [vmem:[%s3 + $0x2c] sm:$0xf]
  %v106 = vld [vmem:[%s3 + $0x30] sm:$0xf]
  %v107 = vld [vmem:[%s3 + $0x34] sm:$0xf]
  %v108 = vld [vmem:[%s3 + $0x38] sm:$0xf]
  %v109 = vld [vmem:[%s3 + $0x3c] sm:$0xf]
  %v110 = vld [vmem:[%s4] sm:$0x1]
  %v112 = vlaneseq
  %v113 = vshrl.u32 %v112, 7
  %v114 = vsub.s32 0, %v113
  %v115 = vrot.slane %v110, %v114
  %v133 = vunpack.c.l.b16 %v94
  %v134 = vunpack.c.l.b16 %v95
  %v135 = vunpack.c.l.b16 %v96
  %v136 = vunpack.c.l.b16 %v97
  %v137 = vunpack.c.l.b16 %v98
  %v138 = vunpack.c.l.b16 %v99
  %v139 = vunpack.c.l.b16 %v100
  %v140 = vunpack.c.l.b16 %v101
  %v141 = vunpack.c.l.b16 %v102
  %v142 = vunpack.c.l.b16 %v103
  %v143 = vunpack.c.l.b16 %v104
  %v144 = vunpack.c.l.b16 %v105
  %v145 = vunpack.c.l.b16 %v106
  %v146 = vunpack.c.l.b16 %v107
  %v147 = vunpack.c.l.b16 %v108
  %v148 = vunpack.c.l.b16 %v109
  %v149 = vpack.c.b16 %v134, %v133
  %v150 = vpack.c.b16 %v136, %v135
  %v151 = vpack.c.b16 %v138, %v137
  %v152 = vpack.c.b16 %v140, %v139
  %v153 = vpack.c.b16 %v142, %v141
  %v154 = vpack.c.b16 %v144, %v143
  %v155 = vpack.c.b16 %v146, %v145
  %v156 = vpack.c.b16 %v148, %v147
  %165 = vmatprep.subr.bf16.mxu0 0
  %166 = vmatpush1.bf16.msra.mxu0 %v156
  %167 = vmatprep.subr.bf16.mxu0 0
  %168 = vmatpush1.bf16.msra.mxu0 %v155
  %169 = vmatprep.subr.bf16.mxu0 0
  %170 = vmatpush1.bf16.msra.mxu0 %v154
  %171 = vmatprep.subr.bf16.mxu0 0
  %172 = vmatpush1.bf16.msra.mxu0 %v153
  %173 = vmatprep.subr.bf16.mxu0 0
  %174 = vmatpush1.bf16.msra.mxu0 %v152
  %175 = vmatprep.subr.bf16.mxu0 0
  %176 = vmatpush1.bf16.msra.mxu0 %v151
  %177 = vmatprep.subr.bf16.mxu0 0
  %178 = vmatpush1.bf16.msra.mxu0 %v150
  %179 = vmatprep.subr.bf16.mxu0 0
  %180 = vmatpush1.bf16.msra.mxu0 %v149
  %181 = vmatprep.subr.bf16.mxu0 0
  %182 = vmatpush2.bf16.msra.mxu0 0
  %183 = vmatprep.subr.bf16.mxu0 0
  %184 = vmatpush2.bf16.msra.mxu0 0
  %185 = vmatprep.subr.bf16.mxu0 0
  %186 = vmatpush2.bf16.msra.mxu0 0
  %187 = vmatprep.subr.bf16.mxu0 0
  %188 = vmatpush2.bf16.msra.mxu0 0
  %189 = vmatprep.subr.bf16.mxu0 0
  %190 = vmatpush2.bf16.msra.mxu0 0
  %191 = vmatprep.subr.bf16.mxu0 0
  %192 = vmatpush2.bf16.msra.mxu0 0
  %193 = vmatprep.subr.bf16.mxu0 0
  %194 = vmatpush2.bf16.msra.mxu0 0
  %195 = vmatprep.subr.bf16.mxu0 0
  %196 = vmatpush2.bf16.msra.mxu0 0
  %197 = vmatprep.mubr.bf16.mxu0 0
  %198 = vmatmul.mubr.bf16.gmra.mxu0 %v93
  %v199 = vpop.f32.mrf.mxu0
  %v200 = vadd.f32 %v115, %v199
  %v201 = vpop.f32.mrf.mxu0
  %v202 = vpop.f32.mrf.mxu0
  %v203 = vadd.f32 %v115, %v202
  %v204 = vpop.f32.mrf.mxu0
  %205 = vdwg.mxu0
  %v206 = vmax.f32 %v200, 0.0
  %v207 = vmax.f32 %v203, 0.0
  %v208 = vpack.c.bf16 %v207, %v206
  %v209 = vld [vmem:[%s5] sm:$0xf]
  %v210 = vld [vmem:[%s5 + $0x4] sm:$0xf]
  %v211 = vld [vmem:[%s5 + $0x8] sm:$0xf]
  %v212 = vld [vmem:[%s5 + $0xc] sm:$0xf]
  %v213 = vld [vmem:[%s5 + $0x10] sm:$0xf]
  %v214 = vld [vmem:[%s5 + $0x14] sm:$0xf]
  %v215 = vld [vmem:[%s5 + $0x18] sm:$0xf]
  %v216 = vld [vmem:[%s5 + $0x1c] sm:$0xf]
  %v217 = vld [vmem:[%s5 + $0x20] sm:$0xf]
  %v218 = vld [vmem:[%s5 + $0x24] sm:$0xf]
  %v219 = vld [vmem:[%s5 + $0x28] sm:$0xf]
  %v220 = vld [vmem:[%s5 + $0x2c] sm:$0xf]
  %v221 = vld [vmem:[%s5 + $0x30] sm:$0xf]
  %v222 = vld [vmem:[%s5 + $0x34] sm:$0xf]
  %v223 = vld [vmem:[%s5 + $0x38] sm:$0xf]
  %v224 = vld [vmem:[%s5 + $0x3c] sm:$0xf]
  %v225 = vld [vmem:[%s6] sm:$0x1]
  %v227 = vlaneseq
  %v228 = vshrl.u32 %v227, 7
  %v229 = vsub.s32 0, %v228
  %v230 = vrot.slane %v225, %v229
  %v248 = vunpack.c.l.b16 %v209
  %v249 = vunpack.c.l.b16 %v210
  %v250 = vunpack.c.l.b16 %v211
  %v251 = vunpack.c.l.b16 %v212
  %v252 = vunpack.c.l.b16 %v213
  %v253 = vunpack.c.l.b16 %v214
  %v254 = vunpack.c.l.b16 %v215
  %v255 = vunpack.c.l.b16 %v216
  %v256 = vunpack.c.l.b16 %v217
  %v257 = vunpack.c.l.b16 %v218
  %v258 = vunpack.c.l.b16 %v219
  %v259 = vunpack.c.l.b16 %v220
  %v260 = vunpack.c.l.b16 %v221
  %v261 = vunpack.c.l.b16 %v222
  %v262 = vunpack.c.l.b16 %v223
  %v263 = vunpack.c.l.b16 %v224
  %v264 = vpack.c.b16 %v249, %v248
  %v265 = vpack.c.b16 %v251, %v250
  %v266 = vpack.c.b16 %v253, %v252
  %v267 = vpack.c.b16 %v255, %v254
  %v268 = vpack.c.b16 %v257, %v256
  %v269 = vpack.c.b16 %v259, %v258
  %v270 = vpack.c.b16 %v261, %v260
  %v271 = vpack.c.b16 %v263, %v262
  %280 = vmatprep.subr.bf16.mxu0 0
  %281 = vmatpush1.bf16.msra.mxu0 %v271
  %282 = vmatprep.subr.bf16.mxu0 0
  %283 = vmatpush1.bf16.msra.mxu0 %v270
  %284 = vmatprep.subr.bf16.mxu0 0
  %285 = vmatpush1.bf16.msra.mxu0 %v269
  %286 = vmatprep.subr.bf16.mxu0 0
  %287 = vmatpush1.bf16.msra.mxu0 %v268
  %288 = vmatprep.subr.bf16.mxu0 0
  %289 = vmatpush1.bf16.msra.mxu0 %v267
  %290 = vmatprep.subr.bf16.mxu0 0
  %291 = vmatpush1.bf16.msra.mxu0 %v266
  %292 = vmatprep.subr.bf16.mxu0 0
  %293 = vmatpush1.bf16.msra.mxu0 %v265
  %294 = vmatprep.subr.bf16.mxu0 0
  %295 = vmatpush1.bf16.msra.mxu0 %v264
  %296 = vmatprep.subr.bf16.mxu0 0
  %297 = vmatpush2.bf16.msra.mxu0 0
  %298 = vmatprep.subr.bf16.mxu0 0
  %299 = vmatpush2.bf16.msra.mxu0 0
  %300 = vmatprep.subr.bf16.mxu0 0
  %301 = vmatpush2.bf16.msra.mxu0 0
  %302 = vmatprep.subr.bf16.mxu0 0
  %303 = vmatpush2.bf16.msra.mxu0 0
  %304 = vmatprep.subr.bf16.mxu0 0
  %305 = vmatpush2.bf16.msra.mxu0 0
  %306 = vmatprep.subr.bf16.mxu0 0
  %307 = vmatpush2.bf16.msra.mxu0 0
  %308 = vmatprep.subr.bf16.mxu0 0
  %309 = vmatpush2.bf16.msra.mxu0 0
  %310 = vmatprep.subr.bf16.mxu0 0
  %311 = vmatpush2.bf16.msra.mxu0 0
  %312 = vmatprep.mubr.bf16.mxu0 0
  %313 = vmatmul.mubr.bf16.gmra.mxu0 %v208
  %v314 = vpop.f32.mrf.mxu0
  %v315 = vadd.f32 %v230, %v314
  %v316 = vpop.f32.mrf.mxu0
  %v317 = vpop.f32.mrf.mxu0
  %v318 = vadd.f32 %v230, %v317
  %v319 = vpop.f32.mrf.mxu0
  %320 = vdwg.mxu0
  %v321 = vpack.c.bf16 %v318, %v315
  %v323 = vunpack.c.l.b16 %v321
  %v324 = vunpack.c.h.b16 %v321
  %v325 = vpack.c.b16 %v323, %v323
  %v326 = vpack.c.b16 %v324, %v324
  %329 = vst [vmem:[%s7] sm:$0xf] %v325
  %330 = vst [vmem:[%s7 + $0x4] sm:$0xf] %v326
  // Predicated region
  $region30: #{qnet_forward.1} parent=0 // pred_check
    _
  $region31: #{qnet_forward.1} parent=0 // pred_check_branch
    %332 = sbr.rel (0) target = $region33
  $region32: #{qnet_forward.1} parent=0 // pred_region
    _
  $region33: #{qnet_forward.1} parent=0 // pred_fallthru
    _
  // Predicated region
  $region34: #{qnet_forward.1} parent=0 // pred_check
    _
  $region35: #{qnet_forward.1} parent=0 // pred_check_branch
    %334 = sbr.rel (0) target = $region37
  $region36: #{qnet_forward.1} parent=0 // pred_region
    _
  $region37: #{qnet_forward.1} parent=0 // pred_fallthru
    _

</llo_original>
